<compile_context>
chip_gen: v7x
topology: tpu7x:2x2x1
jax: 0.10.0
libtpu: 0.0.40
codegen_flags: <defaults>
</compile_context>

<pallas_src>
import functools

import jax
import jax.numpy as jnp
from jax.experimental import pallas as pl
from jax.experimental.pallas import tpu as pltpu


def _sdpa_kernel(q_ref, k_ref, v_ref, *rest, temperature, has_mask):
    # One (batch, head, q-tile) grid step.
    #   q_ref: (TQ, D)  k_ref: (Lk, D)  v_ref: (Lk, Dv)
    #   mask_ref (optional): broadcastable to (TQ, Lk)
    #   out_ref: (TQ, Dv)  attn_ref: (TQ, Lk)
    if has_mask:
        mask_ref, out_ref, attn_ref = rest
    else:
        out_ref, attn_ref = rest

    # q / temperature in the native dtype (bf16 stays bf16 -> MXU fast path).
    q = q_ref[...] * (1.0 / temperature)
    k = k_ref[...]
    v = v_ref[...]

    # scores[i, j] = sum_d q[i, d] * k[j, d]  -- contract over D, f32 accumulation,
    # no explicit transpose copy of k.
    scores = jax.lax.dot_general(
        q, k, dimension_numbers=(((1,), (1,)), ((), ())),
        preferred_element_type=jnp.float32)                     # (TQ, Lk) f32

    if has_mask:
        m = mask_ref[...]                                       # bf16 0/1, broadcastable
        scores = jnp.where(m == 0, jnp.float32(-1000000000.0), scores)

    # Numerically stable softmax over Lk (Lk is whole per block -> single pass).
    row_max = jnp.max(scores, axis=-1, keepdims=True)
    exps = jnp.exp(scores - row_max)
    denom = jnp.sum(exps, axis=-1, keepdims=True)
    inv = pl.reciprocal(denom)                                  # EUP, full precision
    attn = exps * inv                                           # (TQ, Lk) f32

    attn_ref[...] = attn.astype(attn_ref.dtype)

    # output = attn @ v ; feed attn in v's dtype so the MXU stays on the fast path.
    out = jnp.dot(attn.astype(v.dtype), v, preferred_element_type=jnp.float32)
    out_ref[...] = out.astype(out_ref.dtype)


def _pick_block_q(Lq):
    if Lq <= 512:
        return Lq
    return next((t for t in (512, 256, 128) if Lq % t == 0), Lq)


def scaled_dot_product_attention(q, k, v, mask=None, *, temperature, block_q=None):
    """q: (B,H,Lq,D), k: (B,H,Lk,D), v: (B,H,Lk,Dv),
    mask: broadcastable to (B,H,Lq,Lk) or None. Returns (output, attn)."""
    B, H, Lq, D = q.shape
    Lk = k.shape[2]
    Dv = v.shape[3]

    if block_q is None:
        block_q = _pick_block_q(Lq)
    assert Lq % block_q == 0, (Lq, block_q)
    n_q = Lq // block_q

    has_mask = mask is not None
    sq = pl.Squeezed()

    in_specs = [
        pl.BlockSpec((sq, sq, block_q, D), lambda b, h, qi: (b, h, qi, 0)),
        # k/v index_maps ignore the q-tile index -> same block reused across qi.
        pl.BlockSpec((sq, sq, Lk, D), lambda b, h, qi: (b, h, 0, 0)),
        pl.BlockSpec((sq, sq, Lk, Dv), lambda b, h, qi: (b, h, 0, 0)),
    ]
    args = [q, k, v]

    if has_mask:
        mask = jnp.asarray(mask)
        if mask.ndim < 4:
            mask = mask.reshape((1,) * (4 - mask.ndim) + mask.shape)
        mB, mH, mLq, mLk = mask.shape
        for dim, full in ((mB, B), (mH, H), (mLq, Lq), (mLk, Lk)):
            if dim not in (1, full):
                raise ValueError(
                    f"mask shape {mask.shape} not broadcastable to {(B, H, Lq, Lk)}")
        # Keep the mask un-broadcast in HBM and in a compact dtype (bf16 0/1):
        # size-1 dims just reuse block index 0, so nothing is materialized.
        mask_c = (mask != 0).astype(jnp.bfloat16)
        mblk_q = block_q if mLq != 1 else 1
        mblk_k = Lk if mLk != 1 else 1

        def mask_index_map(b, h, qi, _bB=(mB != 1), _bH=(mH != 1), _bQ=(mLq != 1)):
            return (b if _bB else 0, h if _bH else 0, qi if _bQ else 0, 0)

        in_specs.append(pl.BlockSpec((sq, sq, mblk_q, mblk_k), mask_index_map))
        args.append(mask_c)

    out_specs = [
        pl.BlockSpec((sq, sq, block_q, Dv), lambda b, h, qi: (b, h, qi, 0)),
        pl.BlockSpec((sq, sq, block_q, Lk), lambda b, h, qi: (b, h, qi, 0)),
    ]
    out_shape = (
        jax.ShapeDtypeStruct((B, H, Lq, Dv), q.dtype),
        jax.ShapeDtypeStruct((B, H, Lq, Lk), q.dtype),
    )

    kernel = functools.partial(
        _sdpa_kernel, temperature=float(temperature), has_mask=has_mask)

    out, attn = pl.pallas_call(
        kernel,
        out_shape=out_shape,
        grid_spec=pltpu.PrefetchScalarGridSpec(
            num_scalar_prefetch=0,
            grid=(B, H, n_q),
            in_specs=in_specs,
            out_specs=out_specs,
        ),
        compiler_params=pltpu.CompilerParams(
            dimension_semantics=("parallel", "parallel", "parallel"),
            vmem_limit_bytes=48 * 1024 * 1024,  # safe on v7x (64 MiB) and v5e/v6e (128 MiB)
        ),
    )(*args)
    return out, attn


def _reference(q, k, v, mask, temperature):
    scores = jnp.einsum("bhqd,bhkd->bhqk", q / temperature, k)
    if mask is not None:
        scores = jnp.where(mask == 0, -1000000000.0, scores)
    attn = jax.nn.softmax(scores, axis=-1)
    out = jnp.einsum("bhqk,bhkd->bhqd", attn, v)
    return out, attn


if __name__ == "__main__":
    key = jax.random.PRNGKey(0)
    B, H, L, D = 2, 2, 8, 32
    temperature = float(D) ** 0.5

    kq, kk, kv = jax.random.split(key, 3)
    q = jax.random.normal(kq, (B, H, L, D), dtype=jnp.float32)
    k = jax.random.normal(kk, (B, H, L, D), dtype=jnp.float32)
    v = jax.random.normal(kv, (B, H, L, D), dtype=jnp.float32)

    # Causal mask left un-broadcast (1, 1, L, L) -- exercises the masked_fill path
    # without materializing a (B, H, L, L) mask in HBM.
    causal = jnp.tril(jnp.ones((L, L), dtype=jnp.float32))[None, None, :, :]

    out, attn = scaled_dot_product_attention(q, k, v, causal, temperature=temperature)
    jax.block_until_ready((out, attn))
    ref_out, ref_attn = _reference(q, k, v, causal, temperature)
    assert jnp.allclose(out, ref_out, atol=1e-5, rtol=1e-5)
    assert jnp.allclose(attn, ref_attn, atol=1e-5, rtol=1e-5)

    # No-mask specialization (mask input dropped entirely).
    out2, attn2 = scaled_dot_product_attention(q, k, v, None, temperature=temperature)
    jax.block_until_ready((out2, attn2))
    ref_out2, ref_attn2 = _reference(q, k, v, None, temperature)
    assert jnp.allclose(out2, ref_out2, atol=1e-5, rtol=1e-5)
    assert jnp.allclose(attn2, ref_attn2, atol=1e-5, rtol=1e-5)

    print("KERNEL_OK")
</pallas_src>

<mosaic_0001>
module attributes {stable_mosaic.version = 11 : i64} {
  func.func @_sdpa_kernel(%arg0: i32, %arg1: i32, %arg2: i32, %arg3: memref<1x1x8x32xf32, #tpu.memory_space<vmem>>, %arg4: memref<1x1x8x32xf32, #tpu.memory_space<vmem>>, %arg5: memref<1x1x8x32xf32, #tpu.memory_space<vmem>>, %arg6: memref<1x1x8x8xbf16, #tpu.memory_space<vmem>>, %arg7: memref<1x1x8x32xf32, #tpu.memory_space<vmem>>, %arg8: memref<1x1x8x8xf32, #tpu.memory_space<vmem>>) attributes {dimension_semantics = [#tpu.dimension_semantics<parallel>, #tpu.dimension_semantics<parallel>, #tpu.dimension_semantics<parallel>], iteration_bounds = array<i64: 2, 2, 1>, scalar_prefetch = 0 : i64, scratch_operands = 0 : i64, tpu.core_type = #tpu.core_type<tc>, window_params = [{transform_indices = @transform_0, window_bounds = array<i64: 1, 1, 8, 32>}, {transform_indices = @transform_1, window_bounds = array<i64: 1, 1, 8, 32>}, {transform_indices = @transform_2, window_bounds = array<i64: 1, 1, 8, 32>}, {transform_indices = @transform_3, window_bounds = array<i64: 1, 1, 8, 8>}, {transform_indices = @transform_4, window_bounds = array<i64: 1, 1, 8, 32>}, {transform_indices = @transform_5, window_bounds = array<i64: 1, 1, 8, 8>}]} {
    %c0 = arith.constant 0 : index
    %c0_0 = arith.constant 0 : index
    %c0_1 = arith.constant 0 : index
    %c0_2 = arith.constant 0 : index
    %0 = vector.load %arg3[%c0, %c0_0, %c0_1, %c0_2] : memref<1x1x8x32xf32, #tpu.memory_space<vmem>>, vector<1x1x8x32xf32>
    %1 = vector.shape_cast %0 : vector<1x1x8x32xf32> to vector<8x32xf32>
    %cst = arith.constant 0.176776692 : f32
    %2 = vector.broadcast %cst : f32 to vector<8x32xf32>
    %3 = arith.mulf %1, %2 : vector<8x32xf32>
    %c0_3 = arith.constant 0 : index
    %c0_4 = arith.constant 0 : index
    %c0_5 = arith.constant 0 : index
    %c0_6 = arith.constant 0 : index
    %4 = vector.load %arg4[%c0_3, %c0_4, %c0_5, %c0_6] : memref<1x1x8x32xf32, #tpu.memory_space<vmem>>, vector<1x1x8x32xf32>
    %5 = vector.shape_cast %4 : vector<1x1x8x32xf32> to vector<8x32xf32>
    %c0_7 = arith.constant 0 : index
    %c0_8 = arith.constant 0 : index
    %c0_9 = arith.constant 0 : index
    %c0_10 = arith.constant 0 : index
    %6 = vector.load %arg5[%c0_7, %c0_8, %c0_9, %c0_10] : memref<1x1x8x32xf32, #tpu.memory_space<vmem>>, vector<1x1x8x32xf32>
    %7 = vector.shape_cast %6 : vector<1x1x8x32xf32> to vector<8x32xf32>
    %cst_11 = arith.constant dense<0.000000e+00> : vector<8x8xf32>
    %8 = tpu.matmul %3, %5, %cst_11 {dimension_numbers = #tpu.dot_dimension_numbers<[1], [1], [0], [0], [0, 0, 1, 0], [], []>} : vector<8x32xf32>, vector<8x32xf32>, vector<8x8xf32> -> vector<8x8xf32>
    %c0_12 = arith.constant 0 : index
    %c0_13 = arith.constant 0 : index
    %c0_14 = arith.constant 0 : index
    %c0_15 = arith.constant 0 : index
    %9 = vector.load %arg6[%c0_12, %c0_13, %c0_14, %c0_15] : memref<1x1x8x8xbf16, #tpu.memory_space<vmem>>, vector<1x1x8x8xbf16>
    %10 = vector.shape_cast %9 : vector<1x1x8x8xbf16> to vector<8x8xbf16>
    %cst_16 = arith.constant 0.000000e+00 : bf16
    %11 = vector.broadcast %cst_16 : bf16 to vector<8x8xbf16>
    %12 = arith.cmpf oeq, %10, %11 : vector<8x8xbf16>
    %cst_17 = arith.constant -1.000000e+09 : f32
    %13 = vector.broadcast %cst_17 : f32 to vector<8x8xf32>
    %14 = arith.select %12, %13, %8 : vector<8x8xi1>, vector<8x8xf32>
    %cst_18 = arith.constant dense<0xFF800000> : vector<8xf32>
    %15 = vector.multi_reduction <maximumf>, %14, %cst_18 [1] : vector<8x8xf32> to vector<8xf32>
    %16 = vector.shape_cast %15 : vector<8xf32> to vector<8x1xf32>
    %17 = vector.broadcast %16 : vector<8x1xf32> to vector<8x8xf32>
    %18 = arith.subf %14, %17 : vector<8x8xf32>
    %19 = math.exp %18 : vector<8x8xf32>
    %cst_19 = arith.constant dense<0.000000e+00> : vector<8xf32>
    %20 = vector.multi_reduction <add>, %19, %cst_19 [1] : vector<8x8xf32> to vector<8xf32>
    %21 = vector.shape_cast %20 : vector<8xf32> to vector<8x1xf32>
    %22 = tpu.reciprocal %21 : vector<8x1xf32> -> vector<8x1xf32>
    %23 = vector.broadcast %22 : vector<8x1xf32> to vector<8x8xf32>
    %24 = arith.mulf %19, %23 : vector<8x8xf32>
    %c0_20 = arith.constant 0 : index
    %c0_21 = arith.constant 0 : index
    %c0_22 = arith.constant 0 : index
    %c0_23 = arith.constant 0 : index
    %25 = vector.load %arg8[%c0_20, %c0_21, %c0_22, %c0_23] : memref<1x1x8x8xf32, #tpu.memory_space<vmem>>, vector<1x1x8x8xf32>
    %26 = vector.shape_cast %25 : vector<1x1x8x8xf32> to vector<8x8xf32>
    %27 = vector.shape_cast %24 : vector<8x8xf32> to vector<1x1x8x8xf32>
    tpu.vector_store %arg8[%c0_20, %c0_21, %c0_22, %c0_23], %27 {strides = array<i32>} : memref<1x1x8x8xf32, #tpu.memory_space<vmem>>, vector<1x1x8x8xf32>,
    %cst_24 = arith.constant dense<0.000000e+00> : vector<8x32xf32>
    %28 = tpu.matmul %24, %7, %cst_24 {dimension_numbers = #tpu.dot_dimension_numbers<[1], [0], [0], [1], [0, 0, 1, 1], [], []>} : vector<8x8xf32>, vector<8x32xf32>, vector<8x32xf32> -> vector<8x32xf32>
    %c0_25 = arith.constant 0 : index
    %c0_26 = arith.constant 0 : index
    %c0_27 = arith.constant 0 : index
    %c0_28 = arith.constant 0 : index
    %29 = vector.load %arg7[%c0_25, %c0_26, %c0_27, %c0_28] : memref<1x1x8x32xf32, #tpu.memory_space<vmem>>, vector<1x1x8x32xf32>
    %30 = vector.shape_cast %29 : vector<1x1x8x32xf32> to vector<8x32xf32>
    %31 = vector.shape_cast %28 : vector<8x32xf32> to vector<1x1x8x32xf32>
    tpu.vector_store %arg7[%c0_25, %c0_26, %c0_27, %c0_28], %31 {strides = array<i32>} : memref<1x1x8x32xf32, #tpu.memory_space<vmem>>, vector<1x1x8x32xf32>,
    return
  }
  func.func @transform_0(%arg0: i32, %arg1: i32, %arg2: i32) -> (i32, i32, i32, i32) {
    %c0_i32 = arith.constant 0 : i32
    %c0_i32_0 = arith.constant 0 : i32
    return %arg0, %arg1, %arg2, %c0_i32 : i32, i32, i32, i32
  }
  func.func @transform_1(%arg0: i32, %arg1: i32, %arg2: i32) -> (i32, i32, i32, i32) {
    %c0_i32 = arith.constant 0 : i32
    %c0_i32_0 = arith.constant 0 : i32
    %c0_i32_1 = arith.constant 0 : i32
    return %arg0, %arg1, %c0_i32, %c0_i32_0 : i32, i32, i32, i32
  }
  func.func @transform_2(%arg0: i32, %arg1: i32, %arg2: i32) -> (i32, i32, i32, i32) {
    %c0_i32 = arith.constant 0 : i32
    %c0_i32_0 = arith.constant 0 : i32
    %c0_i32_1 = arith.constant 0 : i32
    return %arg0, %arg1, %c0_i32, %c0_i32_0 : i32, i32, i32, i32
  }
  func.func @transform_3(%arg0: i32, %arg1: i32, %arg2: i32) -> (i32, i32, i32, i32) {
    %c0_i32 = arith.constant 0 : i32
    %c0_i32_0 = arith.constant 0 : i32
    %c0_i32_1 = arith.constant 0 : i32
    %c0_i32_2 = arith.constant 0 : i32
    return %c0_i32, %c0_i32_0, %arg2, %c0_i32_1 : i32, i32, i32, i32
  }
  func.func @transform_4(%arg0: i32, %arg1: i32, %arg2: i32) -> (i32, i32, i32, i32) {
    %c0_i32 = arith.constant 0 : i32
    %c0_i32_0 = arith.constant 0 : i32
    return %arg0, %arg1, %arg2, %c0_i32 : i32, i32, i32, i32
  }
  func.func @transform_5(%arg0: i32, %arg1: i32, %arg2: i32) -> (i32, i32, i32, i32) {
    %c0_i32 = arith.constant 0 : i32
    %c0_i32_0 = arith.constant 0 : i32
    return %arg0, %arg1, %arg2, %c0_i32 : i32, i32, i32, i32
  }
}

</mosaic_0001>

<llo_original>
// kernel: tpu_custom_call.1
$region0: #{tpu_custom_call.1}
  #allocation0 [shape = 'u32[]', space=smem, size = 0x4, offset = 0x4, fixed_abs, tag = 'smem constant byte address 0x4 - core index']
  #allocation1 [shape = 'u32[144,128]{1,0:T(1,128)}', space=vmem, size = 0x12000, scoped, tag = 'internal scratch']
  %s0 = inlined_call_operand.hbm [shape: f32[2,2,8,32], index: 0, kind: input, shape index: {}]
  %s1 = inlined_call_operand.hbm [shape: f32[2,2,8,32], index: 1, kind: input, shape index: {}]
  %s2 = inlined_call_operand.hbm [shape: f32[2,2,8,32], index: 2, kind: input, shape index: {}]
  %s3 = inlined_call_operand.vmem [shape: bf16[1,1,8,8], index: 3, kind: input, shape index: {}]
  %s4 = inlined_call_operand.hbm [shape: f32[2,2,8,32], index: 4, kind: output, shape index: {0}]
  %s5 = inlined_call_operand.hbm [shape: f32[2,2,8,8], index: 5, kind: output, shape index: {1}]
  %6 = xla_tuple %s4, %s5
  %s7 = sld [smem:[#allocation0]]
  $region69: #{tpu_custom_call.1} parent=0
    _
  %s9 = ssub.s32 1, %s7
  %s10 = scalar_select 0, %s9, %s7
  $region1: #{tpu_custom_call.1} parent=0
    #allocation2 [shape = 'u8[8192]{0}', space=vmem, size = 0x2000, scoped, tag = 'input window, operand 0']
    #allocation3 [shape = 's32[2]{0}', space=sflag, size = 0x8, scoped, tag = 'scoped memory for tpu_custom_call.1']
    #allocation4 [shape = 's32[2]{0}', space=sflag, size = 0x8, scoped, tag = 'scoped memory for tpu_custom_call.1']
    #allocation5 [shape = 'u8[8192]{0}', space=vmem, size = 0x2000, scoped, tag = 'input window, operand 1']
    #allocation6 [shape = 's32[2]{0}', space=sflag, size = 0x8, scoped, tag = 'scoped memory for tpu_custom_call.1']
    #allocation7 [shape = 'u8[8192]{0}', space=vmem, size = 0x2000, scoped, tag = 'input window, operand 2']
    #allocation8 [shape = 'u8[8192]{0}', space=vmem, size = 0x2000, scoped, tag = 'output window, operand 0']
    #allocation9 [shape = 'u8[8192]{0}', space=vmem, size = 0x2000, scoped, tag = 'output window, operand 1']
    #allocation10 [shape = 's32[2]{0}', space=sflag, size = 0x8, scoped, tag = 'scoped memory for tpu_custom_call.1']
    %11 = vsyncpa [#allocation3], 0
    %s12 = scalar_lea.sflag [#allocation3], 1
    %13 = vsyncpa %s12, 0
    %14 = vsyncpa [#allocation6], 0
    %s15 = scalar_lea.sflag [#allocation6], 1
    %16 = vsyncpa %s15, 0
    %17 = vsyncpa [#allocation4], 0
    %s18 = scalar_lea.sflag [#allocation4], 1
    %19 = vsyncpa %s18, 0
    %20 = vsyncpa [#allocation10], 0
    %s21 = scalar_lea.sflag [#allocation10], 1
    %22 = vsyncpa %s21, 0
    loop: start=0, step=1, limit=6
    $region2: #{tpu_custom_call.1} parent=1 // loop_pre_header
      _
    $region3: #{tpu_custom_call.1} parent=1 // loop_header
      %s24 = sphi 0, %s28
      %p25 = scmp.ge.s32.totalorder %s24, 6
      %s31 = sphi 0, %s50
      %s32 = sphi 0, %s46
      %s33 = sphi 0, %s42
      %s34 = sphi 0, %s31
      %s35 = sphi 0, %s32
      %s36 = sphi 0, %s33
      %s37 = sphi 0, %s34
      %s38 = sphi 0, %s35
      %s39 = sphi 0, %s36
      %s57 = sphi 0, %s59
      %s60 = sphi 0, %s57
      %s61 = sphi 0, %s60
      %s77 = sphi 0, %s61
      %s85 = sphi 0, %s87
      %s88 = sphi 0, %s85
      %s89 = sphi 0, %s88
      %s105 = sphi 0, %s89
      %s113 = sphi 0, %s115
      %s116 = sphi 0, %s113
      %s117 = sphi 0, %s116
      %s133 = sphi 0, %s117
      %s139 = sphi 0, %s141
      %s142 = sphi 0, %s139
      %s143 = sphi 0, %s142
      %s159 = sphi 0, %s143
      %s169 = sphi 0, %s171
      %s172 = sphi 0, %s169
      %s173 = sphi 0, %s172
      %s189 = sphi 0, %s173
      %s199 = sphi 0, %s201
      %s202 = sphi 0, %s199
      %s203 = sphi 0, %s202
      %s219 = sphi 0, %s203
    $region4: #{tpu_custom_call.1} parent=1 // loop_header_branch
      %27 = sbr.rel (%p25) target = $region8
    $region5: #{tpu_custom_call.1} parent=1 // loop_body
      %s29 = ssub.s32 %s24, 1
      %s30 = ssub.s32 %s24, 2
      %s40 = sadd.s32 1, %s33
      %p41 = scmp.ge.s32.totalorder %s40, 1
      %s42 = scalar_select %p41, 0, %s40
      %s43 = sadd.s32 1, %s32
      %s44 = scalar_select %p41, %s43, %s32
      %p45 = scmp.ge.s32.totalorder %s44, 2
      %s46 = scalar_select %p45, 0, %s44
      %s47 = sadd.s32 1, %s31
      %s48 = scalar_select %p45, %s47, %s31
      %p49 = scmp.ge.s32.totalorder %s48, 2
      %s50 = scalar_select %p49, 0, %s48
      %s51 = ssub.s32 %s31, %s50
      %s52 = ssub.s32 %s32, %s46
      %s53 = sor.u32 %s51, %s52
      %s54 = ssub.s32 %s33, %s42
      %s55 = sor.u32 %s53, %s54
      %p56 = scmp.eq.s32.totalorder %s55, 0
      %s58 = sadd.s32 %s57, 1
      %s59 = scalar_select %p56, %s57, %s58
      %p62 = pneg %p56
      %p63 = scmp.eq.s32.totalorder %s24, 3
      %p64 = por %p62, %p63
      %p65 = scmp.ne.s32.totalorder %s57, %s60
      %p66 = scmp.eq.s32.totalorder %s24, 0
      %p67 = por %p65, %p66
      %p68 = scmp.ne.s32.totalorder %s57, %s60
      %p69 = scmp.eq.s32.totalorder %s29, 3
      %p70 = por %p68, %p69
      %p71 = scmp.ne.s32.totalorder %s60, %s61
      %p72 = scmp.eq.s32.totalorder %s29, 0
      %p73 = por %p71, %p72
      %p74 = scmp.ne.s32.totalorder %s60, %s61
      %p75 = scmp.eq.s32.totalorder %s30, 3
      %p76 = por %p74, %p75
      %p78 = scmp.ne.s32.totalorder %s61, %s77
      %p79 = scmp.eq.s32.totalorder %s30, 0
      %p80 = por %p78, %p79
      %s81 = ssub.s32 %s31, %s50
      %s82 = ssub.s32 %s32, %s46
      %s83 = sor.u32 %s81, %s82
      %p84 = scmp.eq.s32.totalorder %s83, 0
      %s86 = sadd.s32 %s85, 1
      %s87 = scalar_select %p84, %s85, %s86
      %p90 = pneg %p84
      %p91 = scmp.eq.s32.totalorder %s24, 3
      %p92 = por %p90, %p91
      %p93 = scmp.ne.s32.totalorder %s85, %s88
      %p94 = scmp.eq.s32.totalorder %s24, 0
      %p95 = por %p93, %p94
      %p96 = scmp.ne.s32.totalorder %s85, %s88
      %p97 = scmp.eq.s32.totalorder %s29, 3
      %p98 = por %p96, %p97
      %p99 = scmp.ne.s32.totalorder %s88, %s89
      %p100 = scmp.eq.s32.totalorder %s29, 0
      %p101 = por %p99, %p100
      %p102 = scmp.ne.s32.totalorder %s88, %s89
      %p103 = scmp.eq.s32.totalorder %s30, 3
      %p104 = por %p102, %p103
      %p106 = scmp.ne.s32.totalorder %s89, %s105
      %p107 = scmp.eq.s32.totalorder %s30, 0
      %p108 = por %p106, %p107
      %s109 = ssub.s32 %s31, %s50
      %s110 = ssub.s32 %s32, %s46
      %s111 = sor.u32 %s109, %s110
      %p112 = scmp.eq.s32.totalorder %s111, 0
      %s114 = sadd.s32 %s113, 1
      %s115 = scalar_select %p112, %s113, %s114
      %p118 = pneg %p112
      %p119 = scmp.eq.s32.totalorder %s24, 3
      %p120 = por %p118, %p119
      %p121 = scmp.ne.s32.totalorder %s113, %s116
      %p122 = scmp.eq.s32.totalorder %s24, 0
      %p123 = por %p121, %p122
      %p124 = scmp.ne.s32.totalorder %s113, %s116
      %p125 = scmp.eq.s32.totalorder %s29, 3
      %p126 = por %p124, %p125
      %p127 = scmp.ne.s32.totalorder %s116, %s117
      %p128 = scmp.eq.s32.totalorder %s29, 0
      %p129 = por %p127, %p128
      %p130 = scmp.ne.s32.totalorder %s116, %s117
      %p131 = scmp.eq.s32.totalorder %s30, 3
      %p132 = por %p130, %p131
      %p134 = scmp.ne.s32.totalorder %s117, %s133
      %p135 = scmp.eq.s32.totalorder %s30, 0
      %p136 = por %p134, %p135
      %s137 = ssub.s32 %s33, %s42
      %p138 = scmp.eq.s32.totalorder %s137, 0
      %s140 = sadd.s32 %s139, 1
      %s141 = scalar_select %p138, %s139, %s140
      %p144 = pneg %p138
      %p145 = scmp.eq.s32.totalorder %s24, 3
      %p146 = por %p144, %p145
      %p147 = scmp.ne.s32.totalorder %s139, %s142
      %p148 = scmp.eq.s32.totalorder %s24, 0
      %p149 = por %p147, %p148
      %p150 = scmp.ne.s32.totalorder %s139, %s142
      %p151 = scmp.eq.s32.totalorder %s29, 3
      %p152 = por %p150, %p151
      %p153 = scmp.ne.s32.totalorder %s142, %s143
      %p154 = scmp.eq.s32.totalorder %s29, 0
      %p155 = por %p153, %p154
      %p156 = scmp.ne.s32.totalorder %s142, %s143
      %p157 = scmp.eq.s32.totalorder %s30, 3
      %p158 = por %p156, %p157
      %p160 = scmp.ne.s32.totalorder %s143, %s159
      %p161 = scmp.eq.s32.totalorder %s30, 0
      %p162 = por %p160, %p161
      %s163 = ssub.s32 %s31, %s50
      %s164 = ssub.s32 %s32, %s46
      %s165 = sor.u32 %s163, %s164
      %s166 = ssub.s32 %s33, %s42
      %s167 = sor.u32 %s165, %s166
      %p168 = scmp.eq.s32.totalorder %s167, 0
      %s170 = sadd.s32 %s169, 1
      %s171 = scalar_select %p168, %s169, %s170
      %p174 = pneg %p168
      %p175 = scmp.eq.s32.totalorder %s24, 3
      %p176 = por %p174, %p175
      %p177 = scmp.ne.s32.totalorder %s169, %s172
      %p178 = scmp.eq.s32.totalorder %s24, 0
      %p179 = por %p177, %p178
      %p180 = scmp.ne.s32.totalorder %s169, %s172
      %p181 = scmp.eq.s32.totalorder %s29, 3
      %p182 = por %p180, %p181
      %p183 = scmp.ne.s32.totalorder %s172, %s173
      %p184 = scmp.eq.s32.totalorder %s29, 0
      %p185 = por %p183, %p184
      %p186 = scmp.ne.s32.totalorder %s172, %s173
      %p187 = scmp.eq.s32.totalorder %s30, 3
      %p188 = por %p186, %p187
      %p190 = scmp.ne.s32.totalorder %s173, %s189
      %p191 = scmp.eq.s32.totalorder %s30, 0
      %p192 = por %p190, %p191
      %s193 = ssub.s32 %s31, %s50
      %s194 = ssub.s32 %s32, %s46
      %s195 = sor.u32 %s193, %s194
      %s196 = ssub.s32 %s33, %s42
      %s197 = sor.u32 %s195, %s196
      %p198 = scmp.eq.s32.totalorder %s197, 0
      %s200 = sadd.s32 %s199, 1
      %s201 = scalar_select %p198, %s199, %s200
      %p204 = pneg %p198
      %p205 = scmp.eq.s32.totalorder %s24, 3
      %p206 = por %p204, %p205
      %p207 = scmp.ne.s32.totalorder %s199, %s202
      %p208 = scmp.eq.s32.totalorder %s24, 0
      %p209 = por %p207, %p208
      %p210 = scmp.ne.s32.totalorder %s199, %s202
      %p211 = scmp.eq.s32.totalorder %s29, 3
      %p212 = por %p210, %p211
      %p213 = scmp.ne.s32.totalorder %s202, %s203
      %p214 = scmp.eq.s32.totalorder %s29, 0
      %p215 = por %p213, %p214
      %p216 = scmp.ne.s32.totalorder %s202, %s203
      %p217 = scmp.eq.s32.totalorder %s30, 3
      %p218 = por %p216, %p217
      %p220 = scmp.ne.s32.totalorder %s203, %s219
      %p221 = scmp.eq.s32.totalorder %s30, 0
      %p222 = por %p220, %p221
      %p223 = scmp.le.s32.totalorder 1, %s24
      %p224 = scmp.lt.s32.totalorder %s24, 5
      %p225 = pnand %p223, %p224
      %p226 = pneg %p225
      // Predicated region
      $region9: #{tpu_custom_call.1} parent=5 // pred_check
        _
      $region10: #{tpu_custom_call.1} parent=5 // pred_check_branch
        %228 = sbr.rel (%p225) target = $region12
      $region11: #{tpu_custom_call.1} parent=5 // pred_region
        %s229 = ssub.s32 %s24, 1
        // Predicated region
        $region13: #{tpu_custom_call.1} parent=11 // pred_check
          %p230 = pneg %p155
        $region14: #{tpu_custom_call.1} parent=11 // pred_check_branch
          %232 = sbr.rel (%p230) target = $region16
        $region15: #{tpu_custom_call.1} parent=11 // pred_region
          %p233 = scmp.lt.s32.totalorder %s36, 0
          %s234 = scalar_select %p233, %s36, 0
          %s235 = smul.addr %s234, 4
          %s236 = scalar_lea.vmem %s3, %s235
        $region16: #{tpu_custom_call.1} parent=11 // pred_fallthru
          _
      $region12: #{tpu_custom_call.1} parent=5 // pred_fallthru
        _
      %p237 = scmp.lt.s32.totalorder %s24, 4
      // Predicated region
      $region17: #{tpu_custom_call.1} parent=5 // pred_check
        %p238 = pneg %p237
      $region18: #{tpu_custom_call.1} parent=5 // pred_check_branch
        %240 = sbr.rel (%p238) target = $region20
      $region19: #{tpu_custom_call.1} parent=5 // pred_region
        // Predicated region
        $region21: #{tpu_custom_call.1} parent=19 // pred_check
          %p241 = pneg %p67
        $region22: #{tpu_custom_call.1} parent=19 // pred_check_branch
          %243 = sbr.rel (%p241) target = $region24
        $region23: #{tpu_custom_call.1} parent=19 // pred_region
          %s244 = sand.u32 %s57, 1
          %s245 = scalar_lea.sflag [#allocation3], %s244
          %s246 = sand.u32 %s57, 1
          %s247 = smul.addr %s246, 8
          %s248 = scalar_lea.vmem [#allocation2], %s247
          %s250 = ssub.s32 128, 128
          %251 = vsyncadd %s245, %s250
          %s252 = sadd.s32 %s33, %s32
          %s253 = smul.addr %s31, 2
          %s254 = sadd.s32 %s252, %s253
          %s255 = smul.addr %s254, 128
          %s256 = scalar_lea.hbm %s0, %s255
          %s258 = sshll.u32 %s248, 4
          %s259 = int_to_ptr.vmem [resolvable:$true] %s258
          %261 = dma.hbm_to_vmem [thread:$0]  %s256, 128, %s259, %s245
        $region24: #{tpu_custom_call.1} parent=19 // pred_fallthru
          _
        // Predicated region
        $region25: #{tpu_custom_call.1} parent=19 // pred_check
          %p262 = pneg %p95
        $region26: #{tpu_custom_call.1} parent=19 // pred_check_branch
          %264 = sbr.rel (%p262) target = $region28
        $region27: #{tpu_custom_call.1} parent=19 // pred_region
          %s265 = sand.u32 %s24, 1
          %s266 = scalar_lea.sflag [#allocation6], %s265
          %s267 = sand.u32 %s85, 1
          %s268 = smul.addr %s267, 8
          %s269 = scalar_lea.vmem [#allocation5], %s268
          %s271 = ssub.s32 128, 128
          %272 = vsyncadd %s266, %s271
          %s273 = smul.addr %s31, 2
          %s274 = sadd.s32 %s32, %s273
          %s275 = smul.addr %s274, 128
          %s276 = scalar_lea.hbm %s1, %s275
          %s278 = sshll.u32 %s269, 4
          %s279 = int_to_ptr.vmem [resolvable:$true] %s278
          %281 = dma.hbm_to_vmem [thread:$0]  %s276, 128, %s279, %s266
        $region28: #{tpu_custom_call.1} parent=19 // pred_fallthru
          _
        // Predicated region
        $region29: #{tpu_custom_call.1} parent=19 // pred_check
          %p282 = pneg %p123
        $region30: #{tpu_custom_call.1} parent=19 // pred_check_branch
          %284 = sbr.rel (%p282) target = $region32
        $region31: #{tpu_custom_call.1} parent=19 // pred_region
          %s285 = sand.u32 %s24, 1
          %s286 = scalar_lea.sflag [#allocation6], %s285
          %s287 = sand.u32 %s113, 1
          %s288 = smul.addr %s287, 8
          %s289 = scalar_lea.vmem [#allocation7], %s288
          %s291 = ssub.s32 128, 128
          %292 = vsyncadd %s286, %s291
          %s293 = smul.addr %s31, 2
          %s294 = sadd.s32 %s32, %s293
          %s295 = smul.addr %s294, 128
          %s296 = scalar_lea.hbm %s2, %s295
          %s298 = sshll.u32 %s289, 4
          %s299 = int_to_ptr.vmem [resolvable:$true] %s298
          %301 = dma.hbm_to_vmem [thread:$0]  %s296, 128, %s299, %s286
        $region32: #{tpu_custom_call.1} parent=19 // pred_fallthru
          _
      $region20: #{tpu_custom_call.1} parent=5 // pred_fallthru
        _
      %p302 = scmp.le.s32.totalorder 1, %s24
      %p303 = scmp.lt.s32.totalorder %s24, 5
      %p304 = pnand %p302, %p303
      %p305 = pneg %p304
      // Predicated region
      $region33: #{tpu_custom_call.1} parent=5 // pred_check
        _
      $region34: #{tpu_custom_call.1} parent=5 // pred_check_branch
        %307 = sbr.rel (%p304) target = $region36
      $region35: #{tpu_custom_call.1} parent=5 // pred_region
        %s308 = ssub.s32 %s24, 1
        %s309 = sand.u32 %s60, 1
        %s310 = scalar_lea.sflag [#allocation3], %s309
        %s311 = sand.u32 %s60, 1
        %s312 = smul.addr %s311, 8
        %s313 = scalar_lea.vmem [#allocation2], %s312
        // Predicated region
        $region37: #{tpu_custom_call.1} parent=35 // pred_check
          %p314 = pneg %p73
        $region38: #{tpu_custom_call.1} parent=35 // pred_check_branch
          %316 = sbr.rel (%p314) target = $region40
        $region39: #{tpu_custom_call.1} parent=35 // pred_region
          %317 = dma.done %s310, 128
        $region40: #{tpu_custom_call.1} parent=35 // pred_fallthru
          _
        %s318 = sand.u32 %s29, 1
        %s319 = scalar_lea.sflag [#allocation6], %s318
        %s320 = sand.u32 %s88, 1
        %s321 = smul.addr %s320, 8
        %s322 = scalar_lea.vmem [#allocation5], %s321
        // Predicated region
        $region41: #{tpu_custom_call.1} parent=35 // pred_check
          %p323 = pneg %p101
        $region42: #{tpu_custom_call.1} parent=35 // pred_check_branch
          %325 = sbr.rel (%p323) target = $region44
        $region43: #{tpu_custom_call.1} parent=35 // pred_region
          %326 = dma.done %s319, 128
        $region44: #{tpu_custom_call.1} parent=35 // pred_fallthru
          _
        %s327 = sand.u32 %s29, 1
        %s328 = scalar_lea.sflag [#allocation6], %s327
        %s329 = sand.u32 %s116, 1
        %s330 = smul.addr %s329, 8
        %s331 = scalar_lea.vmem [#allocation7], %s330
        // Predicated region
        $region45: #{tpu_custom_call.1} parent=35 // pred_check
          %p332 = pneg %p129
        $region46: #{tpu_custom_call.1} parent=35 // pred_check_branch
          %334 = sbr.rel (%p332) target = $region48
        $region47: #{tpu_custom_call.1} parent=35 // pred_region
          %335 = dma.done %s328, 128
        $region48: #{tpu_custom_call.1} parent=35 // pred_fallthru
          _
        %s336 = sand.u32 %s60, 1
        %s337 = scalar_lea.sflag [#allocation3], %s336
        %s338 = sand.u32 %s60, 1
        %s339 = smul.addr %s338, 8
        %s340 = scalar_lea.vmem [#allocation2], %s339
        %p341 = pneg %p73
        %p342 = pneg %p70
        %s343 = sand.u32 %s29, 1
        %s344 = scalar_lea.sflag [#allocation6], %s343
        %s345 = sand.u32 %s88, 1
        %s346 = smul.addr %s345, 8
        %s347 = scalar_lea.vmem [#allocation5], %s346
        %p348 = pneg %p101
        %p349 = pneg %p98
        %s350 = sand.u32 %s29, 1
        %s351 = scalar_lea.sflag [#allocation6], %s350
        %s352 = sand.u32 %s116, 1
        %s353 = smul.addr %s352, 8
        %s354 = scalar_lea.vmem [#allocation7], %s353
        %p355 = pneg %p129
        %p356 = pneg %p126
        %p357 = scmp.lt.s32.totalorder %s36, 0
        %s358 = scalar_select %p357, %s36, 0
        %s359 = smul.addr %s358, 4
        %s360 = scalar_lea.vmem %s3, %s359
        %p361 = pneg %p155
        %p362 = pneg %p152
        %p363 = pneg %p185
        %p364 = pneg %p182
        %s365 = sand.u32 %s172, 1
        %s366 = scalar_lea.sflag [#allocation4], %s365
        %s367 = sand.u32 %s172, 1
        %s368 = smul.addr %s367, 8
        %s369 = scalar_lea.vmem [#allocation8], %s368
        %p370 = pneg %p215
        %p371 = pneg %p212
        %s372 = sand.u32 %s202, 1
        %s373 = scalar_lea.sflag [#allocation10], %s372
        %s374 = sand.u32 %s202, 1
        %s375 = smul.addr %s374, 8
        %s376 = scalar_lea.vmem [#allocation9], %s375
        %p377 = scmp.lt.s32.totalorder %s36, 0
        %s378 = scalar_select %p377, %s36, 0
        %s379 = smul.addr %s378, 4
        %s380 = scalar_lea.vmem %s3, %s379
        %v384 = vld [vmem:[%s313] sm:$0xff]
        %v385 = vmul.f32 %v384, 0.17677669
        %v386 = vld [vmem:[%s322] sm:$0xff]
        %v387 = vld [vmem:[%s331] sm:$0xff]
        %vm388 = vcmask 261120
        %v390 = vsel %vm388, %v385, 0
        %v393 = vsel %vm388, %v386, 0
        %395 = vmatprep.subr.mxu0 0.0
        %396 = vmatpush1.xpose.msra.mxu0 %v393
        %397 = vmatprep.subr.mxu0 0.0
        %398 = vmatpush1.xpose.msra.mxu0 0.0
        %399 = vmatprep.subr.mxu0 0.0
        %400 = vmatpush1.xpose.msra.mxu0 0.0
        %401 = vmatprep.subr.mxu0 0.0
        %402 = vmatpush1.xpose.msra.mxu0 0.0
        %403 = vmatprep.subr.mxu0 0.0
        %404 = vmatpush1.xpose.msra.mxu0 0.0
        %405 = vmatprep.subr.mxu0 0.0
        %406 = vmatpush1.xpose.msra.mxu0 0.0
        %407 = vmatprep.subr.mxu0 0.0
        %408 = vmatpush1.xpose.msra.mxu0 0.0
        %409 = vmatprep.subr.mxu0 0.0
        %410 = vmatpush1.xpose.msra.mxu0 0.0
        %411 = vmatprep.subr.mxu0 0.0
        %412 = vmatpush1.xpose.msra.mxu0 0.0
        %413 = vmatprep.subr.mxu0 0.0
        %414 = vmatpush1.xpose.msra.mxu0 0.0
        %415 = vmatprep.subr.mxu0 0.0
        %416 = vmatpush1.xpose.msra.mxu0 0.0
        %417 = vmatprep.subr.mxu0 0.0
        %418 = vmatpush1.xpose.msra.mxu0 0.0
        %419 = vmatprep.subr.mxu0 0.0
        %420 = vmatpush1.xpose.msra.mxu0 0.0
        %421 = vmatprep.subr.mxu0 0.0
        %422 = vmatpush1.xpose.msra.mxu0 0.0
        %423 = vmatprep.subr.mxu0 0.0
        %424 = vmatpush1.xpose.msra.mxu0 0.0
        %425 = vmatprep.subr.mxu0 0.0
        %426 = vmatpush1.xpose.msra.mxu0 0.0
        %427 = vmatprep.subr.mxu0 0.0
        %428 = vmatpush1.xpose.msra.mxu0 0.0
        %429 = vmatprep.subr.mxu0 0.0
        %430 = vmatpush1.xpose.msra.mxu0 0.0
        %431 = vmatprep.subr.mxu0 0.0
        %432 = vmatpush1.xpose.msra.mxu0 0.0
        %433 = vmatprep.subr.mxu0 0.0
        %434 = vmatpush1.xpose.msra.mxu0 0.0
        %435 = vmatprep.subr.mxu0 0.0
        %436 = vmatpush1.xpose.msra.mxu0 0.0
        %437 = vmatprep.subr.mxu0 0.0
        %438 = vmatpush1.xpose.msra.mxu0 0.0
        %439 = vmatprep.subr.mxu0 0.0
        %440 = vmatpush1.xpose.msra.mxu0 0.0
        %441 = vmatprep.subr.mxu0 0.0
        %442 = vmatpush1.xpose.msra.mxu0 0.0
        %443 = vmatprep.subr.mxu0 0.0
        %444 = vmatpush1.xpose.msra.mxu0 0.0
        %445 = vmatprep.subr.mxu0 0.0
        %446 = vmatpush1.xpose.msra.mxu0 0.0
        %447 = vmatprep.subr.mxu0 0.0
        %448 = vmatpush1.xpose.msra.mxu0 0.0
        %449 = vmatprep.subr.mxu0 0.0
        %450 = vmatpush1.xpose.msra.mxu0 0.0
        %451 = vmatprep.subr.mxu0 0.0
        %452 = vmatpush1.xpose.msra.mxu0 0.0
        %453 = vmatprep.subr.mxu0 0.0
        %454 = vmatpush1.xpose.msra.mxu0 0.0
        %455 = vmatprep.subr.mxu0 0.0
        %456 = vmatpush1.xpose.msra.mxu0 0.0
        %457 = vmatprep.subr.mxu0 0.0
        %458 = vmatpush1.xpose.msra.mxu0 0.0
        %459 = vmatprep.mubr.f32.mxu0 0.0
        %460 = vmatmul.mubr.f32.gmra.mrb[0].mxu0 %v390
        %v461 = vpop.f32.mrb[0].mxu0
        %v462 = vadd.f32 0.0, %v461
        %v463 = vpop.f32.mrb[0].mxu0
        %464 = vdwg.mxu0
        %v465 = vld [vmem:[%s380] sm:$0xf]
        %vm466 = vcmp.eq.bf16.partialorder %v465, 0
        %v467 = vsel %vm466, 65537, 0
        %v468 = vunpack.c.l.b16 %v467
        %vm469 = vcmp.ne.s32.totalorder %v468, 0
        %v470 = vsel %vm469, -1e+09, %v462
        %vm471 = vcmask 64512
        %v472 = vsel %vm471, %v470, -inf
        %473 = vmax.xlane.f32.xlu0 %v472
        %v474 = vpop.xlane.xlu0 %473
        %v475 = vsub.f32 %v470, %v474
        %v476 = vmul.f32 %v475, 1.442695
        %v477 = vpow.pop %v476
        %v478 = vsel %vm471, %v477, 0.0
        %479 = vadd.xlane.f32.xlu0 %v478
        %v480 = vpop.xlane.xlu0 %479
        %v481 = vrcp.pop %v480
        %v482 = vmul.f32 %v477, %v481
        %483 = vst.msk [vmem:[%s376] sm:$0xff] %vm471, %v482
        %v485 = vsel %vm471, %v482, 0
        %487 = vmatprep.subr.mxu0 0.0
        %488 = vmatpush1.msra.mxu0 %v387
        %489 = vmatprep.subr.mxu0 0.0
        %490 = vmatpush1.msra.mxu0 0.0
        %491 = vmatprep.subr.mxu0 0.0
        %492 = vmatpush1.msra.mxu0 0.0
        %493 = vmatprep.subr.mxu0 0.0
        %494 = vmatpush1.msra.mxu0 0.0
        %495 = vmatprep.subr.mxu0 0.0
        %496 = vmatpush1.msra.mxu0 0.0
        %497 = vmatprep.subr.mxu0 0.0
        %498 = vmatpush1.msra.mxu0 0.0
        %499 = vmatprep.subr.mxu0 0.0
        %500 = vmatpush1.msra.mxu0 0.0
        %501 = vmatprep.subr.mxu0 0.0
        %502 = vmatpush1.msra.mxu0 0.0
        %503 = vmatprep.subr.mxu0 0.0
        %504 = vmatpush1.msra.mxu0 0.0
        %505 = vmatprep.subr.mxu0 0.0
        %506 = vmatpush1.msra.mxu0 0.0
        %507 = vmatprep.subr.mxu0 0.0
        %508 = vmatpush1.msra.mxu0 0.0
        %509 = vmatprep.subr.mxu0 0.0
        %510 = vmatpush1.msra.mxu0 0.0
        %511 = vmatprep.subr.mxu0 0.0
        %512 = vmatpush1.msra.mxu0 0.0
        %513 = vmatprep.subr.mxu0 0.0
        %514 = vmatpush1.msra.mxu0 0.0
        %515 = vmatprep.subr.mxu0 0.0
        %516 = vmatpush1.msra.mxu0 0.0
        %517 = vmatprep.subr.mxu0 0.0
        %518 = vmatpush1.msra.mxu0 0.0
        %519 = vmatprep.subr.mxu0 0.0
        %520 = vmatpush1.msra.mxu0 0.0
        %521 = vmatprep.subr.mxu0 0.0
        %522 = vmatpush1.msra.mxu0 0.0
        %523 = vmatprep.subr.mxu0 0.0
        %524 = vmatpush1.msra.mxu0 0.0
        %525 = vmatprep.subr.mxu0 0.0
        %526 = vmatpush1.msra.mxu0 0.0
        %527 = vmatprep.subr.mxu0 0.0
        %528 = vmatpush1.msra.mxu0 0.0
        %529 = vmatprep.subr.mxu0 0.0
        %530 = vmatpush1.msra.mxu0 0.0
        %531 = vmatprep.subr.mxu0 0.0
        %532 = vmatpush1.msra.mxu0 0.0
        %533 = vmatprep.subr.mxu0 0.0
        %534 = vmatpush1.msra.mxu0 0.0
        %535 = vmatprep.subr.mxu0 0.0
        %536 = vmatpush1.msra.mxu0 0.0
        %537 = vmatprep.subr.mxu0 0.0
        %538 = vmatpush1.msra.mxu0 0.0
        %539 = vmatprep.subr.mxu0 0.0
        %540 = vmatpush1.msra.mxu0 0.0
        %541 = vmatprep.subr.mxu0 0.0
        %542 = vmatpush1.msra.mxu0 0.0
        %543 = vmatprep.subr.mxu0 0.0
        %544 = vmatpush1.msra.mxu0 0.0
        %545 = vmatprep.subr.mxu0 0.0
        %546 = vmatpush1.msra.mxu0 0.0
        %547 = vmatprep.subr.mxu0 0.0
        %548 = vmatpush1.msra.mxu0 0.0
        %549 = vmatprep.subr.mxu0 0.0
        %550 = vmatpush1.msra.mxu0 0.0
        %551 = vmatprep.mubr.f32.mxu0 0.0
        %552 = vmatmul.mubr.f32.gmra.mrb[0].mxu0 %v485
        %v553 = vpop.f32.mrb[0].mxu0
        %v554 = vadd.f32 0.0, %v553
        %v555 = vpop.f32.mrb[0].mxu0
        %556 = vdwg.mxu0
        %557 = vst.msk [vmem:[%s369] sm:$0xff] %vm388, %v554
        %s558 = sand.u32 %s172, 1
        %s559 = scalar_lea.sflag [#allocation4], %s558
        %s560 = sand.u32 %s172, 1
        %s561 = smul.addr %s560, 8
        %s562 = scalar_lea.vmem [#allocation8], %s561
        %s563 = sand.u32 %s202, 1
        %s564 = scalar_lea.sflag [#allocation10], %s563
        %s565 = sand.u32 %s202, 1
        %s566 = smul.addr %s565, 8
        %s567 = scalar_lea.vmem [#allocation9], %s566
        // Predicated region
        $region49: #{tpu_custom_call.1} parent=35 // pred_check
          %p568 = pneg %p182
        $region50: #{tpu_custom_call.1} parent=35 // pred_check_branch
          %570 = sbr.rel (%p568) target = $region52
        $region51: #{tpu_custom_call.1} parent=35 // pred_region
          %s572 = ssub.s32 128, 128
          %573 = vsyncadd %s559, %s572
          %s574 = sadd.s32 %s36, %s35
          %s575 = smul.addr %s34, 2
          %s576 = sadd.s32 %s574, %s575
          %s577 = smul.addr %s576, 128
          %s578 = scalar_lea.hbm %s4, %s577
          %s580 = sshll.u32 %s562, 4
          %s581 = int_to_ptr.vmem [resolvable:$true] %s580
          %583 = dma.vmem_to_hbm [thread:$0]  %s581, 128, %s578, %s559
        $region52: #{tpu_custom_call.1} parent=35 // pred_fallthru
          _
        // Predicated region
        $region53: #{tpu_custom_call.1} parent=35 // pred_check
          %p584 = pneg %p212
        $region54: #{tpu_custom_call.1} parent=35 // pred_check_branch
          %586 = sbr.rel (%p584) target = $region56
        $region55: #{tpu_custom_call.1} parent=35 // pred_region
          %s588 = ssub.s32 128, 128
          %589 = vsyncadd %s564, %s588
          %s590 = sadd.s32 %s36, %s35
          %s591 = smul.addr %s34, 2
          %s592 = sadd.s32 %s590, %s591
          %s593 = smul.addr %s592, 128
          %s594 = scalar_lea.hbm %s5, %s593
          %s596 = sshll.u32 %s567, 4
          %s597 = int_to_ptr.vmem [resolvable:$true] %s596
          %599 = dma.vmem_to_hbm [thread:$0]  %s597, 128, %s594, %s564
        $region56: #{tpu_custom_call.1} parent=35 // pred_fallthru
          _
      $region36: #{tpu_custom_call.1} parent=5 // pred_fallthru
        _
      %p600 = scmp.le.s32.totalorder 2, %s24
      // Predicated region
      $region57: #{tpu_custom_call.1} parent=5 // pred_check
        %p601 = pneg %p600
      $region58: #{tpu_custom_call.1} parent=5 // pred_check_branch
        %603 = sbr.rel (%p601) target = $region60
      $region59: #{tpu_custom_call.1} parent=5 // pred_region
        %s604 = ssub.s32 %s24, 2
        // Predicated region
        $region61: #{tpu_custom_call.1} parent=59 // pred_check
          %p605 = pneg %p188
        $region62: #{tpu_custom_call.1} parent=59 // pred_check_branch
          %607 = sbr.rel (%p605) target = $region64
        $region63: #{tpu_custom_call.1} parent=59 // pred_region
          %s608 = sand.u32 %s173, 1
          %s609 = scalar_lea.sflag [#allocation4], %s608
          %s610 = sand.u32 %s173, 1
          %s611 = smul.addr %s610, 8
          %s612 = scalar_lea.vmem [#allocation8], %s611
          %613 = dma.done %s609, 128
        $region64: #{tpu_custom_call.1} parent=59 // pred_fallthru
          _
        // Predicated region
        $region65: #{tpu_custom_call.1} parent=59 // pred_check
          %p614 = pneg %p218
        $region66: #{tpu_custom_call.1} parent=59 // pred_check_branch
          %616 = sbr.rel (%p614) target = $region68
        $region67: #{tpu_custom_call.1} parent=59 // pred_region
          %s617 = sand.u32 %s203, 1
          %s618 = scalar_lea.sflag [#allocation10], %s617
          %s619 = sand.u32 %s203, 1
          %s620 = smul.addr %s619, 8
          %s621 = scalar_lea.vmem [#allocation9], %s620
          %622 = dma.done %s618, 128
        $region68: #{tpu_custom_call.1} parent=59 // pred_fallthru
          _
      $region60: #{tpu_custom_call.1} parent=5 // pred_fallthru
        _
    $region6: #{tpu_custom_call.1} parent=1 // loop_footer
      %s28 = sadd.s32 1, %s24
    $region7: #{tpu_custom_call.1} parent=1 // loop_footer_branch
      %23 = sbr.rel target = $region3
    $region8: #{tpu_custom_call.1} parent=1 // loop_exit
      _
    %623 = vsyncpa [#allocation3], 1
    %s624 = scalar_lea.sflag [#allocation3], 1
    %625 = vsyncpa %s624, 1
    %626 = vsyncpa [#allocation6], 1
    %s627 = scalar_lea.sflag [#allocation6], 1
    %628 = vsyncpa %s627, 1
    %629 = vsyncpa [#allocation4], 1
    %s630 = scalar_lea.sflag [#allocation4], 1
    %631 = vsyncpa %s630, 1
    %632 = vsyncpa [#allocation10], 1
    %s633 = scalar_lea.sflag [#allocation10], 1
    %634 = vsyncpa %s633, 1

</llo_original>
